<compile_context>
chip_gen: v5e
topology: v5e:2x2
jax: 0.10.0
libtpu: 0.0.40
codegen_flags: <defaults>
</compile_context>

<pallas_src>
from functools import partial

import jax
import jax.numpy as jnp
from jax.experimental import pallas as pl
from jax.experimental.pallas import tpu as pltpu

EPS = 1e-5  # nn.LayerNorm default


def _round_up(x, m):
    return ((x + m - 1) // m) * m


def _choose_tile_m(m, tile_m):
    """Row-tile size: big for HBM-roofline, but keep >= 2 grid steps when possible."""
    if m <= 256:
        return m  # single block; splitting would be grid-overhead dominated
    half = _round_up(pl.cdiv(m, 2), 256)       # >= 2 steps for v7x's 2 TCs
    return min(tile_m, half, _round_up(m, 256))


def prenorm_kernel(x_ref, g_ref, b_ref, w_ref, wb_ref, o_ref, *, dim):
    # x_ref: (tile_m, D) in the caller's dtype; ragged last block may hold
    # garbage rows -- they only affect their own (masked) output rows.
    # g_ref / b_ref / wb_ref: (1, D) f32.  w_ref: (D, D) bf16.
    x = x_ref[...].astype(jnp.float32)

    # Hoisted parameter loads / broadcasts.
    g = g_ref[...]
    b = b_ref[...]
    wb = wb_ref[...]

    # Single reduction pass: sum and sum-of-squares.
    inv_d = jnp.float32(1.0 / dim)
    s1 = jnp.sum(x, axis=-1, keepdims=True)
    s2 = jnp.sum(x * x, axis=-1, keepdims=True)
    mean = s1 * inv_d
    # Clamp: E[x^2] - E[x]^2 can cancel to a tiny negative in f32 -> NaN in rsqrt.
    var = jnp.maximum(s2 * inv_d - mean * mean, 0.0)

    xn = (x - mean) * jax.lax.rsqrt(var + EPS)       # f32 LN math (v5e-safe)
    y = (xn * g + b).astype(jnp.bfloat16)            # bf16 operand for the MXU

    out = jnp.dot(y, w_ref[...], preferred_element_type=jnp.float32) + wb
    o_ref[...] = out.astype(o_ref.dtype)


def prenorm(x, gamma, beta, w_fn, b_fn, *, tile_m=512):
    """x: (B, N, D). gamma/beta/b_fn: (D,). w_fn: (D, D). Returns (B, N, D) in x.dtype.

    For best HBM throughput on v6e/v7x pass x (and read the output) in bf16,
    and keep w_fn stored in bf16 so the cast below is a no-op.
    """
    B, N, D = x.shape
    M = B * N
    tm = _choose_tile_m(M, tile_m)
    out_dtype = x.dtype

    x2 = x.reshape(M, D)                                   # free (contiguous)
    g2 = gamma.astype(jnp.float32).reshape(1, D)           # no-ops if pre-cast
    b2 = beta.astype(jnp.float32).reshape(1, D)
    w2 = w_fn.astype(jnp.bfloat16)
    wb2 = b_fn.astype(jnp.float32).reshape(1, D)

    x_bytes = jnp.dtype(x2.dtype).itemsize
    o_bytes = jnp.dtype(out_dtype).itemsize

    # VMEM budget: double-buffered x/out tiles, single-buffered constant params
    # (pl.Buffered(1)), plus tile-scaled headroom for the f32 LN temporaries
    # (x, x*x, xn, y) the compiler keeps live.
    vmem_budget = (
        2 * tm * D * x_bytes                # x tiles (double buffered)
        + 2 * tm * D * o_bytes              # out tiles (double buffered)
        + 1 * D * D * 2                     # bf16 weight, Buffered(1)
        + 3 * D * 4                         # gamma / beta / bias
        + 4 * tm * D * 4                    # f32 elementwise temporaries
        + (2 << 20)                         # fixed headroom
    )
    try:
        phys_vmem = pltpu.get_tpu_info().vmem_capacity_bytes
    except Exception:
        phys_vmem = 64 << 20                # conservative (v7x per-core VMEM)
    vmem_limit = int(min(max(vmem_budget, 16 << 20), phys_vmem - (8 << 20), 110 << 20))

    cost = pl.CostEstimate(
        flops=2 * M * D * D,
        transcendentals=M,                  # one rsqrt per row
        bytes_accessed=M * D * (x_bytes + o_bytes) + D * D * 2 + 3 * D * 4,
    )

    const = pl.Buffered(1)                  # constant index_map -> no double buffer
    out = pl.pallas_call(
        partial(prenorm_kernel, dim=D),
        out_shape=jax.ShapeDtypeStruct((M, D), out_dtype),
        grid_spec=pltpu.PrefetchScalarGridSpec(
            num_scalar_prefetch=0,
            grid=(pl.cdiv(M, tm),),
            in_specs=[
                pl.BlockSpec((tm, D), lambda i: (i, 0)),                           # x rows
                pl.BlockSpec((1, D), lambda i: (0, 0), pipeline_mode=const),       # gamma
                pl.BlockSpec((1, D), lambda i: (0, 0), pipeline_mode=const),       # beta
                pl.BlockSpec((D, D), lambda i: (0, 0), pipeline_mode=const),       # fn weight
                pl.BlockSpec((1, D), lambda i: (0, 0), pipeline_mode=const),       # fn bias
            ],
            out_specs=pl.BlockSpec((tm, D), lambda i: (i, 0)),
        ),
        compiler_params=pltpu.CompilerParams(
            dimension_semantics=("parallel",),
            vmem_limit_bytes=vmem_limit,
        ),
        cost_estimate=cost,
    )(x2, g2, b2, w2, wb2)

    return out.reshape(B, N, D)


def prenorm_ref(x, gamma, beta, w_fn, b_fn):
    xf = x.astype(jnp.float32)
    mean = jnp.mean(xf, axis=-1, keepdims=True)
    var = jnp.mean((xf - mean) ** 2, axis=-1, keepdims=True)
    xn = (xf - mean) * jax.lax.rsqrt(var + EPS)
    y = xn * gamma.astype(jnp.float32) + beta.astype(jnp.float32)
    return (y @ w_fn.astype(jnp.float32) + b_fn.astype(jnp.float32)).astype(x.dtype)


if __name__ == "__main__":
    key = jax.random.PRNGKey(0)
    kx, kg, kb, kw, kwb, kx2, kw2, kwb2 = jax.random.split(key, 8)

    # --- Case 1: tiny shapes (batch, tokens, dim), f32 I/O, single row block ---
    B, N, D = 2, 8, 32
    x = jax.random.normal(kx, (B, N, D), dtype=jnp.float32)
    # nn.LayerNorm init is ones/zeros; perturb so the affine path is exercised.
    gamma = 1.0 + 0.1 * jax.random.normal(kg, (D,), dtype=jnp.float32)
    beta = 0.1 * jax.random.normal(kb, (D,), dtype=jnp.float32)
    # fn = Linear(D, D), deterministic init.
    # TODO(synk): in the real module `fn` is an arbitrary sub-module
    # (Attention / FeedForward); a Linear stand-in is used here.
    w_fn = jax.random.normal(kw, (D, D), dtype=jnp.float32) / jnp.sqrt(D)
    b_fn = 0.1 * jax.random.normal(kwb, (D,), dtype=jnp.float32)

    out = prenorm(x, gamma, beta, w_fn, b_fn)
    jax.block_until_ready(out)
    ref = prenorm_ref(x, gamma, beta, w_fn, b_fn)
    assert out.shape == (B, N, D)
    # bf16 MXU operands -> ~1e-2-level relative error vs the f32 reference.
    assert jnp.allclose(out, ref, atol=3e-2, rtol=3e-2), "case 1 mismatch vs reference"

    # --- Case 2: ViT-like ragged token count (M = 2*197) with bf16 HBM I/O ---
    # Exercises the no-pad ragged last row block and the >=2-step row grid.
    B2, N2, D2 = 2, 197, 64
    x2 = jax.random.normal(kx2, (B2, N2, D2), dtype=jnp.float32).astype(jnp.bfloat16)
    gamma2 = jnp.ones((D2,), jnp.float32)
    beta2 = jnp.zeros((D2,), jnp.float32)
    w_fn2 = jax.random.normal(kw2, (D2, D2), dtype=jnp.float32) / jnp.sqrt(D2)
    b_fn2 = 0.05 * jax.random.normal(kwb2, (D2,), dtype=jnp.float32)

    out2 = prenorm(x2, gamma2, beta2, w_fn2, b_fn2)
    jax.block_until_ready(out2)
    ref2 = prenorm_ref(x2, gamma2, beta2, w_fn2, b_fn2)
    assert out2.shape == (B2, N2, D2)
    assert out2.dtype == jnp.bfloat16
    assert bool(jnp.all(jnp.isfinite(out2.astype(jnp.float32)))), "case 2 non-finite output"
    assert jnp.allclose(out2.astype(jnp.float32), ref2.astype(jnp.float32),
                        atol=1e-1, rtol=1e-1), "case 2 mismatch vs reference"

    print("KERNEL_OK")
</pallas_src>

<mosaic_0001>
module attributes {stable_mosaic.version = 11 : i64} {
  func.func @prenorm_kernel(%arg0: i32, %arg1: memref<16x32xf32, #tpu.memory_space<vmem>>, %arg2: memref<1x32xf32, #tpu.memory_space<vmem>>, %arg3: memref<1x32xf32, #tpu.memory_space<vmem>>, %arg4: memref<32x32xbf16, #tpu.memory_space<vmem>>, %arg5: memref<1x32xf32, #tpu.memory_space<vmem>>, %arg6: memref<16x32xf32, #tpu.memory_space<vmem>>) attributes {dimension_semantics = [#tpu.dimension_semantics<parallel>], iteration_bounds = array<i64: 1>, scalar_prefetch = 0 : i64, scratch_operands = 0 : i64, tpu.core_type = #tpu.core_type<tc>, window_params = [{transform_indices = @transform_0, window_bounds = array<i64: 16, 32>}, {pipeline_mode = #tpu.pipeline_mode<synchronous>, transform_indices = @transform_1, window_bounds = array<i64: 1, 32>}, {pipeline_mode = #tpu.pipeline_mode<synchronous>, transform_indices = @transform_2, window_bounds = array<i64: 1, 32>}, {pipeline_mode = #tpu.pipeline_mode<synchronous>, transform_indices = @transform_3, window_bounds = array<i64: 32, 32>}, {pipeline_mode = #tpu.pipeline_mode<synchronous>, transform_indices = @transform_4, window_bounds = array<i64: 1, 32>}, {transform_indices = @transform_5, window_bounds = array<i64: 16, 32>}]} {
    %c0 = arith.constant 0 : index
    %c0_0 = arith.constant 0 : index
    %0 = vector.load %arg1[%c0, %c0_0] : memref<16x32xf32, #tpu.memory_space<vmem>>, vector<16x32xf32>
    %c0_1 = arith.constant 0 : index
    %c0_2 = arith.constant 0 : index
    %1 = vector.load %arg2[%c0_1, %c0_2] : memref<1x32xf32, #tpu.memory_space<vmem>>, vector<1x32xf32>
    %c0_3 = arith.constant 0 : index
    %c0_4 = arith.constant 0 : index
    %2 = vector.load %arg3[%c0_3, %c0_4] : memref<1x32xf32, #tpu.memory_space<vmem>>, vector<1x32xf32>
    %c0_5 = arith.constant 0 : index
    %c0_6 = arith.constant 0 : index
    %3 = vector.load %arg5[%c0_5, %c0_6] : memref<1x32xf32, #tpu.memory_space<vmem>>, vector<1x32xf32>
    %cst = arith.constant dense<0.000000e+00> : vector<16xf32>
    %4 = vector.multi_reduction <add>, %0, %cst [1] : vector<16x32xf32> to vector<16xf32>
    %5 = vector.shape_cast %4 : vector<16xf32> to vector<16x1xf32>
    %6 = arith.mulf %0, %0 : vector<16x32xf32>
    %cst_7 = arith.constant dense<0.000000e+00> : vector<16xf32>
    %7 = vector.multi_reduction <add>, %6, %cst_7 [1] : vector<16x32xf32> to vector<16xf32>
    %8 = vector.shape_cast %7 : vector<16xf32> to vector<16x1xf32>
    %cst_8 = arith.constant 3.125000e-02 : f32
    %9 = vector.broadcast %cst_8 : f32 to vector<16x1xf32>
    %10 = arith.mulf %5, %9 : vector<16x1xf32>
    %cst_9 = arith.constant 3.125000e-02 : f32
    %11 = vector.broadcast %cst_9 : f32 to vector<16x1xf32>
    %12 = arith.mulf %8, %11 : vector<16x1xf32>
    %13 = arith.mulf %10, %10 : vector<16x1xf32>
    %14 = arith.subf %12, %13 : vector<16x1xf32>
    %cst_10 = arith.constant 0.000000e+00 : f32
    %15 = vector.broadcast %cst_10 : f32 to vector<16x1xf32>
    %16 = arith.maximumf %14, %15 : vector<16x1xf32>
    %17 = vector.broadcast %10 : vector<16x1xf32> to vector<16x32xf32>
    %18 = arith.subf %0, %17 : vector<16x32xf32>
    %cst_11 = arith.constant 9.99999974E-6 : f32
    %19 = vector.broadcast %cst_11 : f32 to vector<16x1xf32>
    %20 = arith.addf %16, %19 : vector<16x1xf32>
    %21 = math.rsqrt %20 : vector<16x1xf32>
    %22 = vector.broadcast %21 : vector<16x1xf32> to vector<16x32xf32>
    %23 = arith.mulf %18, %22 : vector<16x32xf32>
    %24 = vector.broadcast %1 : vector<1x32xf32> to vector<16x32xf32>
    %25 = arith.mulf %23, %24 : vector<16x32xf32>
    %26 = vector.broadcast %2 : vector<1x32xf32> to vector<16x32xf32>
    %27 = arith.addf %25, %26 : vector<16x32xf32>
    %28 = arith.truncf %27 : vector<16x32xf32> to vector<16x32xbf16>
    %c0_12 = arith.constant 0 : index
    %c0_13 = arith.constant 0 : index
    %29 = vector.load %arg4[%c0_12, %c0_13] : memref<32x32xbf16, #tpu.memory_space<vmem>>, vector<32x32xbf16>
    %cst_14 = arith.constant dense<0.000000e+00> : vector<16x32xf32>
    %30 = tpu.matmul %28, %29, %cst_14 {dimension_numbers = #tpu.dot_dimension_numbers<[1], [0], [0], [1], [0, 0, 1, 1], [], []>} : vector<16x32xbf16>, vector<32x32xbf16>, vector<16x32xf32> -> vector<16x32xf32>
    %31 = vector.broadcast %3 : vector<1x32xf32> to vector<16x32xf32>
    %32 = arith.addf %30, %31 : vector<16x32xf32>
    %c0_15 = arith.constant 0 : index
    %c0_16 = arith.constant 0 : index
    %33 = vector.load %arg6[%c0_15, %c0_16] : memref<16x32xf32, #tpu.memory_space<vmem>>, vector<16x32xf32>
    tpu.vector_store %arg6[%c0_15, %c0_16], %32 {strides = array<i32>} : memref<16x32xf32, #tpu.memory_space<vmem>>, vector<16x32xf32>,
    return
  }
  func.func @transform_0(%arg0: i32) -> (i32, i32) {
    %c0_i32 = arith.constant 0 : i32
    %c0_i32_0 = arith.constant 0 : i32
    return %arg0, %c0_i32 : i32, i32
  }
  func.func @transform_1(%arg0: i32) -> (i32, i32) {
    %c0_i32 = arith.constant 0 : i32
    %c0_i32_0 = arith.constant 0 : i32
    %c0_i32_1 = arith.constant 0 : i32
    return %c0_i32, %c0_i32_0 : i32, i32
  }
  func.func @transform_2(%arg0: i32) -> (i32, i32) {
    %c0_i32 = arith.constant 0 : i32
    %c0_i32_0 = arith.constant 0 : i32
    %c0_i32_1 = arith.constant 0 : i32
    return %c0_i32, %c0_i32_0 : i32, i32
  }
  func.func @transform_3(%arg0: i32) -> (i32, i32) {
    %c0_i32 = arith.constant 0 : i32
    %c0_i32_0 = arith.constant 0 : i32
    %c0_i32_1 = arith.constant 0 : i32
    return %c0_i32, %c0_i32_0 : i32, i32
  }
  func.func @transform_4(%arg0: i32) -> (i32, i32) {
    %c0_i32 = arith.constant 0 : i32
    %c0_i32_0 = arith.constant 0 : i32
    %c0_i32_1 = arith.constant 0 : i32
    return %c0_i32, %c0_i32_0 : i32, i32
  }
  func.func @transform_5(%arg0: i32) -> (i32, i32) {
    %c0_i32 = arith.constant 0 : i32
    %c0_i32_0 = arith.constant 0 : i32
    return %arg0, %c0_i32 : i32, i32
  }
}

</mosaic_0001>

<llo_original>
// kernel: tpu_custom_call.1
$region0: #{tpu_custom_call.1}
  #allocation0 [shape = 'u32[]', space=smem, size = 0x4, offset = 0x4, fixed_abs, tag = 'smem constant byte address 0x4 - core index']
  #allocation1 [shape = 'u32[72,128]{1,0:T(1,128)}', space=vmem, size = 0x9000, scoped, tag = 'internal scratch']
  %s0 = inlined_call_operand.hbm [shape: f32[16,32], index: 0, kind: input, shape index: {}]
  %s1 = inlined_call_operand.hbm [shape: f32[1,32], index: 1, kind: input, shape index: {}]
  %s2 = inlined_call_operand.vmem [shape: f32[1,32], index: 2, kind: input, shape index: {}]
  %s3 = inlined_call_operand.hbm [shape: bf16[32,32], index: 3, kind: input, shape index: {}]
  %s4 = inlined_call_operand.vmem [shape: f32[1,32], index: 4, kind: input, shape index: {}]
  %s5 = inlined_call_operand.hbm [shape: f32[16,32], index: 5, kind: output, shape index: {}]
  %s6 = sld [smem:[#allocation0]]
  $region42: #{tpu_custom_call.1} parent=0
    _
  %s8 = ssub.s32 1, %s6
  %s9 = scalar_select 0, %s8, %s6
  $region1: #{tpu_custom_call.1} parent=0
    #allocation2 [shape = 'u8[8192]{0}', space=vmem, size = 0x2000, scoped, tag = 'input window, operand 0, single buffered']
    #allocation3 [shape = 's32[1]{0}', space=sflag, size = 0x4, scoped, tag = 'scoped memory for tpu_custom_call.1']
    #allocation4 [shape = 's32[1]{0}', space=sflag, size = 0x4, scoped, tag = 'scoped memory for tpu_custom_call.1']
    #allocation5 [shape = 'u8[512]{0}', space=vmem, size = 0x400, scoped, tag = 'input window, operand 1, single buffered']
    #allocation6 [shape = 's32[1]{0}', space=sflag, size = 0x4, scoped, tag = 'scoped memory for tpu_custom_call.1']
    #allocation7 [shape = 'u8[8192]{0}', space=vmem, size = 0x2000, scoped, tag = 'input window, operand 3, single buffered']
    #allocation8 [shape = 'u8[8192]{0}', space=vmem, size = 0x2000, scoped, tag = 'output window, operand 0, single buffered']
    %10 = vsyncpa [#allocation3], 0
    %11 = vsyncpa [#allocation6], 0
    %12 = vsyncpa [#allocation4], 0
    // Predicated region
    $region2: #{tpu_custom_call.1} parent=1 // pred_check
      _
    $region3: #{tpu_custom_call.1} parent=1 // pred_check_branch
      %14 = sbr.rel (0) target = $region5
    $region4: #{tpu_custom_call.1} parent=1 // pred_region
      %16 = vsyncadd [#allocation3], 0
      %s17 = sshll.u32 %s0, 4
      %s18 = int_to_ptr.hbm [resolvable:$true] %s17
      %s19 = sshll.u32 [#allocation2], 4
      %s20 = int_to_ptr.vmem [resolvable:$true] %s19
      %25 = dma.hbm_to_vmem [thread:$0]  %s18, 256, %s20, [#allocation3], 128, 128, 8
    $region5: #{tpu_custom_call.1} parent=1 // pred_fallthru
      _
    // Predicated region
    $region6: #{tpu_custom_call.1} parent=1 // pred_check
      _
    $region7: #{tpu_custom_call.1} parent=1 // pred_check_branch
      %27 = sbr.rel (0) target = $region9
    $region8: #{tpu_custom_call.1} parent=1 // pred_region
      %29 = vsyncadd [#allocation6], 0
      %s31 = sshll.u32 %s1, 4
      %s32 = int_to_ptr.hbm [resolvable:$true] %s31
      %s33 = sshll.u32 [#allocation5], 4
      %s34 = int_to_ptr.vmem [resolvable:$true] %s33
      %36 = dma.hbm_to_vmem [thread:$0]  %s32, 16, %s34, [#allocation6]
    $region9: #{tpu_custom_call.1} parent=1 // pred_fallthru
      _
    // Predicated region
    $region10: #{tpu_custom_call.1} parent=1 // pred_check
      _
    $region11: #{tpu_custom_call.1} parent=1 // pred_check_branch
      %38 = sbr.rel (0) target = $region13
    $region12: #{tpu_custom_call.1} parent=1 // pred_region
      _
    $region13: #{tpu_custom_call.1} parent=1 // pred_fallthru
      _
    // Predicated region
    $region14: #{tpu_custom_call.1} parent=1 // pred_check
      _
    $region15: #{tpu_custom_call.1} parent=1 // pred_check_branch
      %40 = sbr.rel (0) target = $region17
    $region16: #{tpu_custom_call.1} parent=1 // pred_region
      %42 = vsyncadd [#allocation6], 0
      %s43 = sshll.u32 %s3, 4
      %s44 = int_to_ptr.hbm [resolvable:$true] %s43
      %s45 = sshll.u32 [#allocation7], 4
      %s46 = int_to_ptr.vmem [resolvable:$true] %s45
      %51 = dma.hbm_to_vmem [thread:$0]  %s44, 256, %s46, [#allocation6], 64, 64, 4
    $region17: #{tpu_custom_call.1} parent=1 // pred_fallthru
      _
    // Predicated region
    $region18: #{tpu_custom_call.1} parent=1 // pred_check
      _
    $region19: #{tpu_custom_call.1} parent=1 // pred_check_branch
      %53 = sbr.rel (0) target = $region21
    $region20: #{tpu_custom_call.1} parent=1 // pred_region
      _
    $region21: #{tpu_custom_call.1} parent=1 // pred_fallthru
      _
    // Predicated region
    $region22: #{tpu_custom_call.1} parent=1 // pred_check
      _
    $region23: #{tpu_custom_call.1} parent=1 // pred_check_branch
      %55 = sbr.rel (0) target = $region25
    $region24: #{tpu_custom_call.1} parent=1 // pred_region
      %57 = dma.done [#allocation3], 256
    $region25: #{tpu_custom_call.1} parent=1 // pred_fallthru
      _
    // Predicated region
    $region26: #{tpu_custom_call.1} parent=1 // pred_check
      _
    $region27: #{tpu_custom_call.1} parent=1 // pred_check_branch
      %59 = sbr.rel (0) target = $region29
    $region28: #{tpu_custom_call.1} parent=1 // pred_region
      %61 = dma.done [#allocation6], 16
    $region29: #{tpu_custom_call.1} parent=1 // pred_fallthru
      _
    // Predicated region
    $region30: #{tpu_custom_call.1} parent=1 // pred_check
      _
    $region31: #{tpu_custom_call.1} parent=1 // pred_check_branch
      %63 = sbr.rel (0) target = $region33
    $region32: #{tpu_custom_call.1} parent=1 // pred_region
      %65 = dma.done [#allocation6], 256
    $region33: #{tpu_custom_call.1} parent=1 // pred_fallthru
      _
    %v67 = vld [vmem:[#allocation2] sm:$0xff]
    %v68 = vld [vmem:[#allocation2 + $0x8] sm:$0xff]
    %v69 = vld [vmem:[#allocation5] sm:$0x1]
    %v70 = vld [vmem:[%s2] sm:$0x1]
    %v71 = vld [vmem:[%s4] sm:$0x1]
    %vm72 = vcmask 261120
    %v73 = vsel %vm72, %v67, 0.0
    %74 = vadd.xlane.f32.xlu0 %v73
    %v75 = vpop.xlane.xlu0 %74
    %v76 = vsel %vm72, %v68, 0.0
    %77 = vadd.xlane.f32.xlu0 %v76
    %v78 = vpop.xlane.xlu0 %77
    %v79 = vmul.f32 %v67, %v67
    %v80 = vmul.f32 %v68, %v68
    %v81 = vsel %vm72, %v79, 0.0
    %82 = vadd.xlane.f32.xlu0 %v81
    %v83 = vpop.xlane.xlu0 %82
    %v84 = vsel %vm72, %v80, 0.0
    %85 = vadd.xlane.f32.xlu0 %v84
    %v86 = vpop.xlane.xlu0 %85
    %v87 = vmul.f32 %v75, 0.03125
    %v88 = vmul.f32 %v78, 0.03125
    %v89 = vmul.f32 %v83, 0.03125
    %v90 = vmul.f32 %v86, 0.03125
    %v91 = vmul.f32 %v87, %v87
    %v92 = vmul.f32 %v88, %v88
    %v93 = vsub.f32 %v89, %v91
    %v94 = vsub.f32 %v90, %v92
    %v95 = vmax.f32 %v93, 0.0
    %v96 = vmax.f32 %v94, 0.0
    %v97 = vsub.f32 %v67, %v87
    %v98 = vsub.f32 %v68, %v88
    %v99 = vadd.f32 %v95, 1e-05
    %v100 = vadd.f32 %v96, 1e-05
    %v101 = vrsqrt.pop %v99
    %v102 = vmul.f32 %v101, %v99
    %v103 = vmul.f32 %v102, %v101
    %v104 = vmul.f32 0.5, %v103
    %v105 = vsub.f32 1.5, %v104
    %v106 = vmul.f32 %v101, %v105
    %vm107 = vweird.f32 %v99
    %vm108 = vweird.f32 %v101
    %vm109 = vmor %vm107, %vm108
    %v110 = vsel %vm109, %v101, %v106
    %v111 = vrsqrt.pop %v100
    %v112 = vmul.f32 %v111, %v100
    %v113 = vmul.f32 %v112, %v111
    %v114 = vmul.f32 0.5, %v113
    %v115 = vsub.f32 1.5, %v114
    %v116 = vmul.f32 %v111, %v115
    %vm117 = vweird.f32 %v100
    %vm118 = vweird.f32 %v111
    %vm119 = vmor %vm117, %vm118
    %v120 = vsel %vm119, %v111, %v116
    %v121 = vmul.f32 %v97, %v110
    %v122 = vmul.f32 %v98, %v120
    %v124 = vperm.slane %v69, 0
    %v126 = vmul.f32 %v121, %v124
    %v127 = vmul.f32 %v122, %v124
    %v129 = vperm.slane %v70, 0
    %v131 = vadd.f32 %v126, %v129
    %v132 = vadd.f32 %v127, %v129
    %v133 = vpack.c.bf16 %v132, %v131
    %v134 = vld [vmem:[#allocation7] sm:$0xf]
    %v135 = vld [vmem:[#allocation7 + $0x4] sm:$0xf]
    %v136 = vld [vmem:[#allocation7 + $0x8] sm:$0xf]
    %v137 = vld [vmem:[#allocation7 + $0xc] sm:$0xf]
    %v139 = vperm.slane %v71, 0
    %v145 = vunpack.c.l.b16 %v134
    %v146 = vunpack.c.l.b16 %v135
    %v147 = vunpack.c.l.b16 %v136
    %v148 = vunpack.c.l.b16 %v137
    %v149 = vpack.c.b16 %v146, %v145
    %v150 = vpack.c.b16 %v148, %v147
    %v154 = vsel %vm72, %v133, 0
    %156 = vmatpush.bf16.msra.mxu0 0
    %157 = vmatpush.bf16.msra.mxu0 0
    %158 = vmatpush.bf16.msra.mxu0 0
    %159 = vmatpush.bf16.msra.mxu0 0
    %160 = vmatpush.bf16.msra.mxu0 0
    %161 = vmatpush.bf16.msra.mxu0 0
    %162 = vmatpush.bf16.msra.mxu0 %v150
    %163 = vmatpush.bf16.msra.mxu0 %v149
    %164 = vmatmul.bf16.gmra.mxu0 %v154
    %v165 = vpop.f32.mrf.mxu0
    %v166 = vadd.f32 %v139, %v165
    %v167 = vpop.f32.mrf.mxu0
    %v168 = vadd.f32 %v139, %v167
    %169 = vdwg.mxu0
    %170 = vst.msk [vmem:[#allocation8] sm:$0xff] %vm72, %v166
    %171 = vst.msk [vmem:[#allocation8 + $0x8] sm:$0xff] %vm72, %v168
    // Predicated region
    $region34: #{tpu_custom_call.1} parent=1 // pred_check
      _
    $region35: #{tpu_custom_call.1} parent=1 // pred_check_branch
      %173 = sbr.rel (0) target = $region37
    $region36: #{tpu_custom_call.1} parent=1 // pred_region
      %175 = vsyncadd [#allocation4], 0
      %s176 = sshll.u32 [#allocation8], 4
      %s177 = int_to_ptr.vmem [resolvable:$true] %s176
      %s178 = sshll.u32 %s5, 4
      %s179 = int_to_ptr.hbm [resolvable:$true] %s178
      %184 = dma.vmem_to_hbm [thread:$0]  %s177, 256, %s179, [#allocation4], 128, 128, 8
    $region37: #{tpu_custom_call.1} parent=1 // pred_fallthru
      _
    // Predicated region
    $region38: #{tpu_custom_call.1} parent=1 // pred_check
      _
    $region39: #{tpu_custom_call.1} parent=1 // pred_check_branch
      %186 = sbr.rel (0) target = $region41
    $region40: #{tpu_custom_call.1} parent=1 // pred_region
      %188 = dma.done [#allocation4], 256
    $region41: #{tpu_custom_call.1} parent=1 // pred_fallthru
      _
    %189 = vsyncpa [#allocation3], 1
    %190 = vsyncpa [#allocation6], 1
    %191 = vsyncpa [#allocation4], 1

</llo_original>
